<compile_context>
chip_gen: v7x
topology: tpu7x:2x2x1
jax: 0.10.0
libtpu: 0.0.40
codegen_flags: <defaults>
</compile_context>

<pallas_src>
import functools

import jax
import jax.numpy as jnp
from jax import lax
from jax.experimental import pallas as pl
from jax.experimental.pallas import tpu as pltpu


def _round_up(v, m):
    return ((v + m - 1) // m) * m


def _mask_conv2d_kernel(x_ref, m_ref, bm_ref, w_ref, o_ref, patches_ref, *,
                        H, W, KH, KW, Cin_pad, HWg):
    # x_ref      : (Cin_pad, HWg)            lane-dense, whole images per block (HWg = NB*H*W)
    # m_ref      : (1, HWg)                  mask as float (nonzero = masked -> zero out)
    # bm_ref     : (KH*KW-1, HWg)            per-tap boundary-validity masks (center tap omitted)
    # w_ref      : (Cout_pad, KH*KW*Cin_pad) packed weight, tap-major / channel-minor columns
    # o_ref      : (Cout_pad, HWg)
    # patches_ref: (KH*KW*Cin_pad, HWg)      VMEM scratch, written one tap at a time

    # masked_fill(mask, 0) -- exact semantics even for Inf/NaN in x
    xm = jnp.where(m_ref[...] != 0.0, 0.0, x_ref[...])      # (Cin_pad, HWg)

    bi = 0
    for kh in range(KH):
        for kw in range(KW):
            dh = kh - (KH // 2)
            dw = kw - (KW // 2)
            t = kh * KW + kw
            row0 = t * Cin_pad                               # 8-aligned static offset
            if dh == 0 and dw == 0:
                patches_ref[row0:row0 + Cin_pad, :] = xm
            else:
                delta = dh * W + dw
                shifted = pltpu.roll(xm, (-delta) % HWg, axis=1)   # XLU lane rotate
                bm = bm_ref[bi:bi + 1, :]                          # (1, HWg), static slice
                patches_ref[row0:row0 + Cin_pad, :] = shifted * bm # one VPU mul per tap
                bi += 1

    # One fused MXU matmul over all taps: (Cout_pad, 9*Cin_pad) @ (9*Cin_pad, HWg)
    out = jnp.dot(w_ref[...], patches_ref[...], preferred_element_type=jnp.float32)
    o_ref[...] = out.astype(o_ref.dtype)


def mask_conv2d(x, mask_bool, weight_oihw, *, vmem_budget_bytes=20 << 20):
    """x: (N, Cin, H, W) f32; mask_bool: (N, 1, H, W) bool; weight_oihw: (Cout, Cin, KH, KW)."""
    N, Cin, H, W = x.shape
    Cout, _, KH, KW = weight_oihw.shape
    HW = H * W
    dtype = x.dtype

    Cin_pad = _round_up(Cin, 8)
    Cout_pad = _round_up(Cout, 8)
    KC = KH * KW * Cin_pad

    # ---- wrapper-side layout plumbing ----
    # x -> (Cin_pad, N*HW): lanes ordered n-major / hw-minor, channels on sublanes (zero-padded).
    x2 = jnp.transpose(x, (1, 0, 2, 3)).reshape(Cin, N * HW)
    x2 = jnp.pad(x2, ((0, Cin_pad - Cin), (0, 0)))
    m2 = mask_bool.astype(dtype).reshape(1, N * HW)

    # Packed weight: column order tap-major, channel-minor over the PADDED channel dim.
    wp = jnp.pad(weight_oihw,
                 ((0, Cout_pad - Cout), (0, Cin_pad - Cin), (0, 0), (0, 0)))
    w_packed = jnp.transpose(wp, (0, 2, 3, 1)).reshape(Cout_pad, KC)

    # Per-image boundary-validity masks in the flattened H*W index space (center tap omitted).
    hi = jnp.arange(H, dtype=jnp.int32)[:, None]
    wi = jnp.arange(W, dtype=jnp.int32)[None, :]
    bm_rows = []
    for kh in range(KH):
        for kw in range(KW):
            dh = kh - (KH // 2)
            dw = kw - (KW // 2)
            if dh == 0 and dw == 0:
                continue
            valid = ((hi + dh >= 0) & (hi + dh < H) &
                     (wi + dw >= 0) & (wi + dw < W))
            bm_rows.append(valid.reshape(HW))
    n_bm = len(bm_rows)
    bm_img = jnp.stack(bm_rows, axis=0).astype(dtype)        # (n_bm, HW)

    # ---- choose how many whole images to fold into one lane tile (v7x-safe VMEM budget) ----
    def footprint(nb):
        hwg = nb * HW
        x_b = Cin_pad * hwg * 4
        m_b = 8 * hwg * 4                      # (1, hwg) pads to 8 sublanes
        bm_b = _round_up(n_bm, 8) * hwg * 4
        w_b = Cout_pad * _round_up(KC, 128) * 4
        o_b = Cout_pad * hwg * 4
        p_b = KC * hwg * 4                     # patches scratch (single-buffered)
        return 2 * (x_b + m_b + bm_b + w_b + o_b) + p_b

    NB = 1
    for cand in range(N, 0, -1):
        if N % cand != 0:
            continue
        if cand != N and (cand * HW) % 128 != 0:   # partial-N tiles must stay lane-aligned
            continue
        if footprint(cand) <= vmem_budget_bytes:
            NB = cand
            break
    HWg = NB * HW
    n_steps = N // NB

    bmask = jnp.tile(bm_img, (1, NB))                        # (n_bm, HWg), resident across grid

    kernel = functools.partial(_mask_conv2d_kernel, H=H, W=W, KH=KH, KW=KW,
                               Cin_pad=Cin_pad, HWg=HWg)

    flops = 2 * N * Cout * Cin * KH * KW * HW
    bytes_accessed = 4 * (x2.size + m2.size + bmask.size + w_packed.size
                          + Cout_pad * N * HW)
    vmem_limit = int(min(max(2 * footprint(NB), 8 << 20), 48 << 20))

    out_flat = pl.pallas_call(
        kernel,
        out_shape=jax.ShapeDtypeStruct((Cout_pad, N * HW), dtype),
        grid_spec=pltpu.PrefetchScalarGridSpec(
            num_scalar_prefetch=0,
            grid=(n_steps,),
            in_specs=[
                pl.BlockSpec((Cin_pad, HWg), lambda g: (0, g)),
                pl.BlockSpec((1, HWg), lambda g: (0, g)),
                pl.BlockSpec((n_bm, HWg), lambda g: (0, 0)),       # resident across grid
                pl.BlockSpec((Cout_pad, KC), lambda g: (0, 0)),    # resident across grid
            ],
            out_specs=pl.BlockSpec((Cout_pad, HWg), lambda g: (0, g)),
            scratch_shapes=[pltpu.VMEM((KC, HWg), dtype)],
        ),
        compiler_params=pltpu.CompilerParams(
            dimension_semantics=("parallel",),
            vmem_limit_bytes=vmem_limit,
        ),
        cost_estimate=pl.CostEstimate(
            flops=flops, transcendentals=0, bytes_accessed=bytes_accessed),
    )(x2, m2, bmask, w_packed)

    out = out_flat[:Cout].reshape(Cout, N, H, W)
    return jnp.transpose(out, (1, 0, 2, 3))


if __name__ == "__main__":
    # Small shapes consistent with the module: N=2, in_ch=4, out_ch=8, H=W=16, kernel=3, padding=1.
    N, Cin, Cout, H, W, K = 2, 4, 8, 16, 16, 3

    key = jax.random.PRNGKey(0)
    kx, km, kw = jax.random.split(key, 3)

    x = jax.random.normal(kx, (N, Cin, H, W), dtype=jnp.float32)
    mask = jax.random.bernoulli(km, 0.3, (N, 1, H, W))          # bool mask, broadcast over channels

    # Deterministic weight init mimicking nn.Conv2d default (kaiming-uniform bound = 1/sqrt(fan_in)).
    fan_in = Cin * K * K
    bound = 1.0 / (fan_in ** 0.5)
    weight = jax.random.uniform(kw, (Cout, Cin, K, K), dtype=jnp.float32,
                                minval=-bound, maxval=bound)

    out = mask_conv2d(x, mask, weight)
    out = jax.block_until_ready(out)

    # Reference: masked_fill + Conv2d(padding=1, bias=False) via XLA conv.
    x_masked = jnp.where(mask, 0.0, x)
    ref = lax.conv_general_dilated(
        x_masked, weight, window_strides=(1, 1), padding=((1, 1), (1, 1)),
        dimension_numbers=("NCHW", "OIHW", "NCHW"))

    assert out.shape == (N, Cout, H, W)
    assert jnp.allclose(out, ref, atol=1e-4, rtol=1e-4), float(jnp.max(jnp.abs(out - ref)))
    print("KERNEL_OK")
</pallas_src>

<mosaic_0001>
module attributes {stable_mosaic.version = 11 : i64} {
  func.func @_mask_conv2d_kernel(%arg0: i32, %arg1: memref<8x512xf32, #tpu.memory_space<vmem>>, %arg2: memref<1x512xf32, #tpu.memory_space<vmem>>, %arg3: memref<8x512xf32, #tpu.memory_space<vmem>>, %arg4: memref<8x72xf32, #tpu.memory_space<vmem>>, %arg5: memref<8x512xf32, #tpu.memory_space<vmem>>, %arg6: memref<72x512xf32, #tpu.memory_space<vmem>>) attributes {dimension_semantics = [#tpu.dimension_semantics<parallel>], iteration_bounds = array<i64: 1>, scalar_prefetch = 0 : i64, scratch_operands = 1 : i64, tpu.core_type = #tpu.core_type<tc>, window_params = [{transform_indices = @transform_0, window_bounds = array<i64: 8, 512>}, {transform_indices = @transform_1, window_bounds = array<i64: 1, 512>}, {pipeline_mode = #tpu.pipeline_mode<synchronous>, transform_indices = @transform_2, window_bounds = array<i64: 8, 512>}, {pipeline_mode = #tpu.pipeline_mode<synchronous>, transform_indices = @transform_3, window_bounds = array<i64: 8, 72>}, {transform_indices = @transform_4, window_bounds = array<i64: 8, 512>}]} {
    %c0 = arith.constant 0 : index
    %c0_0 = arith.constant 0 : index
    %0 = vector.load %arg2[%c0, %c0_0] : memref<1x512xf32, #tpu.memory_space<vmem>>, vector<1x512xf32>
    %cst = arith.constant 0.000000e+00 : f32
    %1 = vector.broadcast %cst : f32 to vector<1x512xf32>
    %2 = arith.cmpf one, %0, %1 : vector<1x512xf32>
    %c0_1 = arith.constant 0 : index
    %c0_2 = arith.constant 0 : index
    %3 = vector.load %arg1[%c0_1, %c0_2] : memref<8x512xf32, #tpu.memory_space<vmem>>, vector<8x512xf32>
    %cst_3 = arith.constant 0.000000e+00 : f32
    %4 = vector.shape_cast %2 : vector<1x512xi1> to vector<1x512xi1>
    %5 = vector.broadcast %4 : vector<1x512xi1> to vector<8x512xi1>
    %6 = vector.broadcast %cst_3 : f32 to vector<8x512xf32>
    %7 = arith.select %5, %6, %3 : vector<8x512xi1>, vector<8x512xf32>
    %c17_i32 = arith.constant 17 : i32
    %8 = tpu.dynamic_rotate %7 by %c17_i32 dim 1 : vector<8x512xf32>, i32 -> vector<8x512xf32>
    %c0_4 = arith.constant 0 : index
    %c0_5 = arith.constant 0 : index
    %9 = vector.load %arg3[%c0_4, %c0_5] : memref<8x512xf32, #tpu.memory_space<vmem>>, vector<1x512xf32>
    %10 = vector.broadcast %9 : vector<1x512xf32> to vector<8x512xf32>
    %11 = arith.mulf %8, %10 : vector<8x512xf32>
    %c0_6 = arith.constant 0 : index
    %c0_7 = arith.constant 0 : index
    %12 = vector.load %arg6[%c0_6, %c0_7] : memref<72x512xf32, #tpu.memory_space<vmem>>, vector<8x512xf32>
    tpu.vector_store %arg6[%c0_6, %c0_7], %11 {strides = array<i32>} : memref<72x512xf32, #tpu.memory_space<vmem>>, vector<8x512xf32>,
    %c16_i32 = arith.constant 16 : i32
    %13 = tpu.dynamic_rotate %7 by %c16_i32 dim 1 : vector<8x512xf32>, i32 -> vector<8x512xf32>
    %c1 = arith.constant 1 : index
    %c0_8 = arith.constant 0 : index
    %14 = vector.load %arg3[%c1, %c0_8] : memref<8x512xf32, #tpu.memory_space<vmem>>, vector<1x512xf32>
    %15 = vector.broadcast %14 : vector<1x512xf32> to vector<8x512xf32>
    %16 = arith.mulf %13, %15 : vector<8x512xf32>
    %c8 = arith.constant 8 : index
    %c0_9 = arith.constant 0 : index
    %17 = vector.load %arg6[%c8, %c0_9] : memref<72x512xf32, #tpu.memory_space<vmem>>, vector<8x512xf32>
    tpu.vector_store %arg6[%c8, %c0_9], %16 {strides = array<i32>} : memref<72x512xf32, #tpu.memory_space<vmem>>, vector<8x512xf32>,
    %c15_i32 = arith.constant 15 : i32
    %18 = tpu.dynamic_rotate %7 by %c15_i32 dim 1 : vector<8x512xf32>, i32 -> vector<8x512xf32>
    %c2 = arith.constant 2 : index
    %c0_10 = arith.constant 0 : index
    %19 = vector.load %arg3[%c2, %c0_10] : memref<8x512xf32, #tpu.memory_space<vmem>>, vector<1x512xf32>
    %20 = vector.broadcast %19 : vector<1x512xf32> to vector<8x512xf32>
    %21 = arith.mulf %18, %20 : vector<8x512xf32>
    %c16 = arith.constant 16 : index
    %c0_11 = arith.constant 0 : index
    %22 = vector.load %arg6[%c16, %c0_11] : memref<72x512xf32, #tpu.memory_space<vmem>>, vector<8x512xf32>
    tpu.vector_store %arg6[%c16, %c0_11], %21 {strides = array<i32>} : memref<72x512xf32, #tpu.memory_space<vmem>>, vector<8x512xf32>,
    %c1_i32 = arith.constant 1 : i32
    %23 = tpu.dynamic_rotate %7 by %c1_i32 dim 1 : vector<8x512xf32>, i32 -> vector<8x512xf32>
    %c3 = arith.constant 3 : index
    %c0_12 = arith.constant 0 : index
    %24 = vector.load %arg3[%c3, %c0_12] : memref<8x512xf32, #tpu.memory_space<vmem>>, vector<1x512xf32>
    %25 = vector.broadcast %24 : vector<1x512xf32> to vector<8x512xf32>
    %26 = arith.mulf %23, %25 : vector<8x512xf32>
    %c24 = arith.constant 24 : index
    %c0_13 = arith.constant 0 : index
    %27 = vector.load %arg6[%c24, %c0_13] : memref<72x512xf32, #tpu.memory_space<vmem>>, vector<8x512xf32>
    tpu.vector_store %arg6[%c24, %c0_13], %26 {strides = array<i32>} : memref<72x512xf32, #tpu.memory_space<vmem>>, vector<8x512xf32>,
    %c32 = arith.constant 32 : index
    %c0_14 = arith.constant 0 : index
    %28 = vector.load %arg6[%c32, %c0_14] : memref<72x512xf32, #tpu.memory_space<vmem>>, vector<8x512xf32>
    tpu.vector_store %arg6[%c32, %c0_14], %7 {strides = array<i32>} : memref<72x512xf32, #tpu.memory_space<vmem>>, vector<8x512xf32>,
    %c511_i32 = arith.constant 511 : i32
    %29 = tpu.dynamic_rotate %7 by %c511_i32 dim 1 : vector<8x512xf32>, i32 -> vector<8x512xf32>
    %c4 = arith.constant 4 : index
    %c0_15 = arith.constant 0 : index
    %30 = vector.load %arg3[%c4, %c0_15] : memref<8x512xf32, #tpu.memory_space<vmem>>, vector<1x512xf32>
    %31 = vector.broadcast %30 : vector<1x512xf32> to vector<8x512xf32>
    %32 = arith.mulf %29, %31 : vector<8x512xf32>
    %c40 = arith.constant 40 : index
    %c0_16 = arith.constant 0 : index
    %33 = vector.load %arg6[%c40, %c0_16] : memref<72x512xf32, #tpu.memory_space<vmem>>, vector<8x512xf32>
    tpu.vector_store %arg6[%c40, %c0_16], %32 {strides = array<i32>} : memref<72x512xf32, #tpu.memory_space<vmem>>, vector<8x512xf32>,
    %c497_i32 = arith.constant 497 : i32
    %34 = tpu.dynamic_rotate %7 by %c497_i32 dim 1 : vector<8x512xf32>, i32 -> vector<8x512xf32>
    %c5 = arith.constant 5 : index
    %c0_17 = arith.constant 0 : index
    %35 = vector.load %arg3[%c5, %c0_17] : memref<8x512xf32, #tpu.memory_space<vmem>>, vector<1x512xf32>
    %36 = vector.broadcast %35 : vector<1x512xf32> to vector<8x512xf32>
    %37 = arith.mulf %34, %36 : vector<8x512xf32>
    %c48 = arith.constant 48 : index
    %c0_18 = arith.constant 0 : index
    %38 = vector.load %arg6[%c48, %c0_18] : memref<72x512xf32, #tpu.memory_space<vmem>>, vector<8x512xf32>
    tpu.vector_store %arg6[%c48, %c0_18], %37 {strides = array<i32>} : memref<72x512xf32, #tpu.memory_space<vmem>>, vector<8x512xf32>,
    %c496_i32 = arith.constant 496 : i32
    %39 = tpu.dynamic_rotate %7 by %c496_i32 dim 1 : vector<8x512xf32>, i32 -> vector<8x512xf32>
    %c6 = arith.constant 6 : index
    %c0_19 = arith.constant 0 : index
    %40 = vector.load %arg3[%c6, %c0_19] : memref<8x512xf32, #tpu.memory_space<vmem>>, vector<1x512xf32>
    %41 = vector.broadcast %40 : vector<1x512xf32> to vector<8x512xf32>
    %42 = arith.mulf %39, %41 : vector<8x512xf32>
    %c56 = arith.constant 56 : index
    %c0_20 = arith.constant 0 : index
    %43 = vector.load %arg6[%c56, %c0_20] : memref<72x512xf32, #tpu.memory_space<vmem>>, vector<8x512xf32>
    tpu.vector_store %arg6[%c56, %c0_20], %42 {strides = array<i32>} : memref<72x512xf32, #tpu.memory_space<vmem>>, vector<8x512xf32>,
    %c495_i32 = arith.constant 495 : i32
    %44 = tpu.dynamic_rotate %7 by %c495_i32 dim 1 : vector<8x512xf32>, i32 -> vector<8x512xf32>
    %c7 = arith.constant 7 : index
    %c0_21 = arith.constant 0 : index
    %45 = vector.load %arg3[%c7, %c0_21] : memref<8x512xf32, #tpu.memory_space<vmem>>, vector<1x512xf32>
    %46 = vector.broadcast %45 : vector<1x512xf32> to vector<8x512xf32>
    %47 = arith.mulf %44, %46 : vector<8x512xf32>
    %c64 = arith.constant 64 : index
    %c0_22 = arith.constant 0 : index
    %48 = vector.load %arg6[%c64, %c0_22] : memref<72x512xf32, #tpu.memory_space<vmem>>, vector<8x512xf32>
    tpu.vector_store %arg6[%c64, %c0_22], %47 {strides = array<i32>} : memref<72x512xf32, #tpu.memory_space<vmem>>, vector<8x512xf32>,
    %c0_23 = arith.constant 0 : index
    %c0_24 = arith.constant 0 : index
    %49 = vector.load %arg4[%c0_23, %c0_24] : memref<8x72xf32, #tpu.memory_space<vmem>>, vector<8x72xf32>
    %c0_25 = arith.constant 0 : index
    %c0_26 = arith.constant 0 : index
    %50 = vector.load %arg6[%c0_25, %c0_26] : memref<72x512xf32, #tpu.memory_space<vmem>>, vector<72x512xf32>
    %cst_27 = arith.constant dense<0.000000e+00> : vector<8x512xf32>
    %51 = tpu.matmul %49, %50, %cst_27 {dimension_numbers = #tpu.dot_dimension_numbers<[1], [0], [0], [1], [0, 0, 1, 1], [], []>} : vector<8x72xf32>, vector<72x512xf32>, vector<8x512xf32> -> vector<8x512xf32>
    %c0_28 = arith.constant 0 : index
    %c0_29 = arith.constant 0 : index
    %52 = vector.load %arg5[%c0_28, %c0_29] : memref<8x512xf32, #tpu.memory_space<vmem>>, vector<8x512xf32>
    tpu.vector_store %arg5[%c0_28, %c0_29], %51 {strides = array<i32>} : memref<8x512xf32, #tpu.memory_space<vmem>>, vector<8x512xf32>,
    return
  }
  func.func @transform_0(%arg0: i32) -> (i32, i32) {
    %c0_i32 = arith.constant 0 : i32
    %c0_i32_0 = arith.constant 0 : i32
    return %c0_i32, %arg0 : i32, i32
  }
  func.func @transform_1(%arg0: i32) -> (i32, i32) {
    %c0_i32 = arith.constant 0 : i32
    %c0_i32_0 = arith.constant 0 : i32
    return %c0_i32, %arg0 : i32, i32
  }
  func.func @transform_2(%arg0: i32) -> (i32, i32) {
    %c0_i32 = arith.constant 0 : i32
    %c0_i32_0 = arith.constant 0 : i32
    %c0_i32_1 = arith.constant 0 : i32
    return %c0_i32, %c0_i32_0 : i32, i32
  }
  func.func @transform_3(%arg0: i32) -> (i32, i32) {
    %c0_i32 = arith.constant 0 : i32
    %c0_i32_0 = arith.constant 0 : i32
    %c0_i32_1 = arith.constant 0 : i32
    return %c0_i32, %c0_i32_0 : i32, i32
  }
  func.func @transform_4(%arg0: i32) -> (i32, i32) {
    %c0_i32 = arith.constant 0 : i32
    %c0_i32_0 = arith.constant 0 : i32
    return %c0_i32, %arg0 : i32, i32
  }
}

</mosaic_0001>

<llo_original>
// kernel: tpu_custom_call.1
$region0: #{tpu_custom_call.1}
  #allocation0 [shape = 'u32[]', space=smem, size = 0x4, offset = 0x4, fixed_abs, tag = 'smem constant byte address 0x4 - core index']
  #allocation1 [shape = 'u32[144,128]{1,0:T(1,128)}', space=vmem, size = 0x12000, scoped, tag = 'internal scratch']
  #allocation2 [shape = 'f32[72,512]{1,0:T(8,128)}', space=vmem, size = 0x24000, scoped, tag = 'scratch operand']
  %s0 = inlined_call_operand.hbm [shape: f32[8,512], index: 0, kind: input, shape index: {}]
  %s1 = inlined_call_operand.hbm [shape: f32[1,512], index: 1, kind: input, shape index: {}]
  %s2 = inlined_call_operand.hbm [shape: f32[8,512], index: 2, kind: input, shape index: {}]
  %s3 = inlined_call_operand.vmem [shape: f32[8,72], index: 3, kind: input, shape index: {}]
  %s4 = inlined_call_operand.hbm [shape: f32[8,512], index: 4, kind: output, shape index: {}]
  %s5 = sld [smem:[#allocation0]]
  $region38: #{tpu_custom_call.1} parent=0
    _
  %s7 = ssub.s32 1, %s5
  %s8 = scalar_select 0, %s7, %s5
  $region1: #{tpu_custom_call.1} parent=0
    #allocation3 [shape = 'u8[16384]{0}', space=vmem, size = 0x4000, scoped, tag = 'input window, operand 0, single buffered']
    #allocation4 [shape = 's32[1]{0}', space=sflag, size = 0x4, scoped, tag = 'scoped memory for tpu_custom_call.1']
    #allocation5 [shape = 's32[1]{0}', space=sflag, size = 0x4, scoped, tag = 'scoped memory for tpu_custom_call.1']
    #allocation6 [shape = 'u8[2048]{0}', space=vmem, size = 0x800, scoped, tag = 'input window, operand 1, single buffered']
    #allocation7 [shape = 's32[1]{0}', space=sflag, size = 0x4, scoped, tag = 'scoped memory for tpu_custom_call.1']
    #allocation8 [shape = 'u8[16384]{0}', space=vmem, size = 0x4000, scoped, tag = 'input window, operand 2, single buffered']
    #allocation9 [shape = 'u8[16384]{0}', space=vmem, size = 0x4000, scoped, tag = 'output window, operand 0, single buffered']
    %9 = vsyncpa [#allocation4], 0
    %10 = vsyncpa [#allocation7], 0
    %11 = vsyncpa [#allocation5], 0
    // Predicated region
    $region2: #{tpu_custom_call.1} parent=1 // pred_check
      _
    $region3: #{tpu_custom_call.1} parent=1 // pred_check_branch
      %13 = sbr.rel (0) target = $region5
    $region4: #{tpu_custom_call.1} parent=1 // pred_region
      %s15 = ssub.s32 512, 512
      %16 = vsyncadd [#allocation4], %s15
      %s18 = sshll.u32 [#allocation3], 4
      %s19 = int_to_ptr.vmem [resolvable:$true] %s18
      %21 = dma.hbm_to_vmem [thread:$0]  %s0, 512, %s19, [#allocation4]
    $region5: #{tpu_custom_call.1} parent=1 // pred_fallthru
      _
    // Predicated region
    $region6: #{tpu_custom_call.1} parent=1 // pred_check
      _
    $region7: #{tpu_custom_call.1} parent=1 // pred_check_branch
      %23 = sbr.rel (0) target = $region9
    $region8: #{tpu_custom_call.1} parent=1 // pred_region
      %s25 = ssub.s32 64, 64
      %26 = vsyncadd [#allocation7], %s25
      %s28 = sshll.u32 [#allocation6], 4
      %s29 = int_to_ptr.vmem [resolvable:$true] %s28
      %31 = dma.hbm_to_vmem [thread:$0]  %s1, 64, %s29, [#allocation7]
    $region9: #{tpu_custom_call.1} parent=1 // pred_fallthru
      _
    // Predicated region
    $region10: #{tpu_custom_call.1} parent=1 // pred_check
      _
    $region11: #{tpu_custom_call.1} parent=1 // pred_check_branch
      %33 = sbr.rel (0) target = $region13
    $region12: #{tpu_custom_call.1} parent=1 // pred_region
      %s35 = ssub.s32 512, 512
      %36 = vsyncadd [#allocation7], %s35
      %s38 = sshll.u32 [#allocation8], 4
      %s39 = int_to_ptr.vmem [resolvable:$true] %s38
      %41 = dma.hbm_to_vmem [thread:$0]  %s2, 512, %s39, [#allocation7]
    $region13: #{tpu_custom_call.1} parent=1 // pred_fallthru
      _
    // Predicated region
    $region14: #{tpu_custom_call.1} parent=1 // pred_check
      _
    $region15: #{tpu_custom_call.1} parent=1 // pred_check_branch
      %43 = sbr.rel (0) target = $region17
    $region16: #{tpu_custom_call.1} parent=1 // pred_region
      _
    $region17: #{tpu_custom_call.1} parent=1 // pred_fallthru
      _
    // Predicated region
    $region18: #{tpu_custom_call.1} parent=1 // pred_check
      _
    $region19: #{tpu_custom_call.1} parent=1 // pred_check_branch
      %45 = sbr.rel (0) target = $region21
    $region20: #{tpu_custom_call.1} parent=1 // pred_region
      %46 = dma.done [#allocation4], 512
    $region21: #{tpu_custom_call.1} parent=1 // pred_fallthru
      _
    // Predicated region
    $region22: #{tpu_custom_call.1} parent=1 // pred_check
      _
    $region23: #{tpu_custom_call.1} parent=1 // pred_check_branch
      %48 = sbr.rel (0) target = $region25
    $region24: #{tpu_custom_call.1} parent=1 // pred_region
      %49 = dma.done [#allocation7], 64
    $region25: #{tpu_custom_call.1} parent=1 // pred_fallthru
      _
    // Predicated region
    $region26: #{tpu_custom_call.1} parent=1 // pred_check
      _
    $region27: #{tpu_custom_call.1} parent=1 // pred_check_branch
      %51 = sbr.rel (0) target = $region29
    $region28: #{tpu_custom_call.1} parent=1 // pred_region
      %52 = dma.done [#allocation7], 512
    $region29: #{tpu_custom_call.1} parent=1 // pred_fallthru
      _
    %v53 = vld [vmem:[#allocation6] sm:$0xf]
    %vm54 = vcmp.ne.f32.partialorder %v53, 0.0
    %v55 = vld [vmem:[#allocation3] sm:$0xff]
    %v56 = vld [vmem:[#allocation3 + $0x8] sm:$0xff]
    %v57 = vld [vmem:[#allocation3 + $0x10] sm:$0xff]
    %v58 = vld [vmem:[#allocation3 + $0x18] sm:$0xff]
    %v59 = vsel %vm54, 1, 0
    %v60 = vlaneseq
    %v61 = vshrl.u32 %v60, 7
    %v62 = vsub.s32 0, %v61
    %v63 = vrot.slane %v59, %v62
    %v64 = vlaneseq
    %v65 = vshrl.u32 %v64, 7
    %v66 = vsub.s32 1, %v65
    %v67 = vrot.slane %v59, %v66
    %v68 = vlaneseq
    %v69 = vshrl.u32 %v68, 7
    %v70 = vsub.s32 2, %v69
    %v71 = vrot.slane %v59, %v70
    %v72 = vlaneseq
    %v73 = vshrl.u32 %v72, 7
    %v74 = vsub.s32 3, %v73
    %v75 = vrot.slane %v59, %v74
    %vm76 = vcmp.eq.s32.totalorder %v63, 1
    %vm77 = vcmp.eq.s32.totalorder %v67, 1
    %vm78 = vcmp.eq.s32.totalorder %v71, 1
    %vm79 = vcmp.eq.s32.totalorder %v75, 1
    %v80 = vsel %vm76, 0.0, %v55
    %v81 = vsel %vm77, 0.0, %v56
    %v82 = vsel %vm78, 0.0, %v57
    %v83 = vsel %vm79, 0.0, %v58
    %84 = vrot.lane.b32.xlu0 %v80, 17
    %v85 = vpop.permute.xlu0 %84
    %86 = vrot.lane.b32.xlu0 %v81, 17
    %v87 = vpop.permute.xlu0 %86
    %88 = vrot.lane.b32.xlu0 %v82, 17
    %v89 = vpop.permute.xlu0 %88
    %90 = vrot.lane.b32.xlu0 %v83, 17
    %v91 = vpop.permute.xlu0 %90
    %v92 = vlaneseq
    %v93 = vand.u32 %v92, 127
    %vm94 = vcmp.lt.s32.totalorder %v93, 17
    %v95 = vsel %vm94, %v89, %v91
    %v96 = vsel %vm94, %v87, %v89
    %v97 = vsel %vm94, %v85, %v87
    %v98 = vsel %vm94, %v91, %v85
    %v99 = vld [vmem:[#allocation8] ss:$8 sm:$0xf]
    %v101 = vlaneseq
    %v102 = vshrl.u32 %v101, 7
    %v103 = vsub.s32 0, %v102
    %v104 = vrot.slane %v99, %v103
    %v105 = vlaneseq
    %v106 = vshrl.u32 %v105, 7
    %v107 = vsub.s32 1, %v106
    %v108 = vrot.slane %v99, %v107
    %v109 = vlaneseq
    %v110 = vshrl.u32 %v109, 7
    %v111 = vsub.s32 2, %v110
    %v112 = vrot.slane %v99, %v111
    %v113 = vlaneseq
    %v114 = vshrl.u32 %v113, 7
    %v115 = vsub.s32 3, %v114
    %v116 = vrot.slane %v99, %v115
    %v121 = vmul.f32 %v98, %v104
    %v122 = vmul.f32 %v97, %v108
    %v123 = vmul.f32 %v96, %v112
    %v124 = vmul.f32 %v95, %v116
    %125 = vst [vmem:[#allocation2] sm:$0xff] %v121
    %126 = vst [vmem:[#allocation2 + $0x8] sm:$0xff] %v122
    %127 = vst [vmem:[#allocation2 + $0x10] sm:$0xff] %v123
    %128 = vst [vmem:[#allocation2 + $0x18] sm:$0xff] %v124
    %129 = vrot.lane.b32.xlu0 %v80, 16
    %v130 = vpop.permute.xlu0 %129
    %131 = vrot.lane.b32.xlu0 %v81, 16
    %v132 = vpop.permute.xlu0 %131
    %133 = vrot.lane.b32.xlu0 %v82, 16
    %v134 = vpop.permute.xlu0 %133
    %135 = vrot.lane.b32.xlu0 %v83, 16
    %v136 = vpop.permute.xlu0 %135
    %vm137 = vcmp.lt.s32.totalorder %v93, 16
    %v138 = vsel %vm137, %v134, %v136
    %v139 = vsel %vm137, %v132, %v134
    %v140 = vsel %vm137, %v130, %v132
    %v141 = vsel %vm137, %v136, %v130
    %s142 = scalar_lea.vmem [#allocation8], 1
    %v143 = vld [vmem:[%s142] ss:$8 sm:$0xf]
    %v145 = vlaneseq
    %v146 = vshrl.u32 %v145, 7
    %v147 = vsub.s32 0, %v146
    %v148 = vrot.slane %v143, %v147
    %v149 = vlaneseq
    %v150 = vshrl.u32 %v149, 7
    %v151 = vsub.s32 1, %v150
    %v152 = vrot.slane %v143, %v151
    %v153 = vlaneseq
    %v154 = vshrl.u32 %v153, 7
    %v155 = vsub.s32 2, %v154
    %v156 = vrot.slane %v143, %v155
    %v157 = vlaneseq
    %v158 = vshrl.u32 %v157, 7
    %v159 = vsub.s32 3, %v158
    %v160 = vrot.slane %v143, %v159
    %v165 = vmul.f32 %v141, %v148
    %v166 = vmul.f32 %v140, %v152
    %v167 = vmul.f32 %v139, %v156
    %v168 = vmul.f32 %v138, %v160
    %169 = vst [vmem:[#allocation2 + $0x20] sm:$0xff] %v165
    %170 = vst [vmem:[#allocation2 + $0x28] sm:$0xff] %v166
    %171 = vst [vmem:[#allocation2 + $0x30] sm:$0xff] %v167
    %172 = vst [vmem:[#allocation2 + $0x38] sm:$0xff] %v168
    %173 = vrot.lane.b32.xlu0 %v80, 15
    %v174 = vpop.permute.xlu0 %173
    %175 = vrot.lane.b32.xlu0 %v81, 15
    %v176 = vpop.permute.xlu0 %175
    %177 = vrot.lane.b32.xlu0 %v82, 15
    %v178 = vpop.permute.xlu0 %177
    %179 = vrot.lane.b32.xlu0 %v83, 15
    %v180 = vpop.permute.xlu0 %179
    %vm181 = vcmp.lt.s32.totalorder %v93, 15
    %v182 = vsel %vm181, %v178, %v180
    %v183 = vsel %vm181, %v176, %v178
    %v184 = vsel %vm181, %v174, %v176
    %v185 = vsel %vm181, %v180, %v174
    %s186 = scalar_lea.vmem [#allocation8], 2
    %v187 = vld [vmem:[%s186] ss:$8 sm:$0xf]
    %v189 = vlaneseq
    %v190 = vshrl.u32 %v189, 7
    %v191 = vsub.s32 0, %v190
    %v192 = vrot.slane %v187, %v191
    %v193 = vlaneseq
    %v194 = vshrl.u32 %v193, 7
    %v195 = vsub.s32 1, %v194
    %v196 = vrot.slane %v187, %v195
    %v197 = vlaneseq
    %v198 = vshrl.u32 %v197, 7
    %v199 = vsub.s32 2, %v198
    %v200 = vrot.slane %v187, %v199
    %v201 = vlaneseq
    %v202 = vshrl.u32 %v201, 7
    %v203 = vsub.s32 3, %v202
    %v204 = vrot.slane %v187, %v203
    %v209 = vmul.f32 %v185, %v192
    %v210 = vmul.f32 %v184, %v196
    %v211 = vmul.f32 %v183, %v200
    %v212 = vmul.f32 %v182, %v204
    %213 = vst [vmem:[#allocation2 + $0x40] sm:$0xff] %v209
    %214 = vst [vmem:[#allocation2 + $0x48] sm:$0xff] %v210
    %215 = vst [vmem:[#allocation2 + $0x50] sm:$0xff] %v211
    %216 = vst [vmem:[#allocation2 + $0x58] sm:$0xff] %v212
    %217 = vrot.lane.b32.xlu0 %v80, 1
    %v218 = vpop.permute.xlu0 %217
    %219 = vrot.lane.b32.xlu0 %v81, 1
    %v220 = vpop.permute.xlu0 %219
    %221 = vrot.lane.b32.xlu0 %v82, 1
    %v222 = vpop.permute.xlu0 %221
    %223 = vrot.lane.b32.xlu0 %v83, 1
    %v224 = vpop.permute.xlu0 %223
    %vm225 = vcmp.lt.s32.totalorder %v93, 1
    %v226 = vsel %vm225, %v222, %v224
    %v227 = vsel %vm225, %v220, %v222
    %v228 = vsel %vm225, %v218, %v220
    %v229 = vsel %vm225, %v224, %v218
    %s230 = scalar_lea.vmem [#allocation8], 3
    %v231 = vld [vmem:[%s230] ss:$8 sm:$0xf]
    %v233 = vlaneseq
    %v234 = vshrl.u32 %v233, 7
    %v235 = vsub.s32 0, %v234
    %v236 = vrot.slane %v231, %v235
    %v237 = vlaneseq
    %v238 = vshrl.u32 %v237, 7
    %v239 = vsub.s32 1, %v238
    %v240 = vrot.slane %v231, %v239
    %v241 = vlaneseq
    %v242 = vshrl.u32 %v241, 7
    %v243 = vsub.s32 2, %v242
    %v244 = vrot.slane %v231, %v243
    %v245 = vlaneseq
    %v246 = vshrl.u32 %v245, 7
    %v247 = vsub.s32 3, %v246
    %v248 = vrot.slane %v231, %v247
    %v253 = vmul.f32 %v229, %v236
    %v254 = vmul.f32 %v228, %v240
    %v255 = vmul.f32 %v227, %v244
    %v256 = vmul.f32 %v226, %v248
    %257 = vst [vmem:[#allocation2 + $0x60] sm:$0xff] %v253
    %258 = vst [vmem:[#allocation2 + $0x68] sm:$0xff] %v254
    %259 = vst [vmem:[#allocation2 + $0x70] sm:$0xff] %v255
    %260 = vst [vmem:[#allocation2 + $0x78] sm:$0xff] %v256
    %261 = vst [vmem:[#allocation2 + $0x80] sm:$0xff] %v80
    %262 = vst [vmem:[#allocation2 + $0x88] sm:$0xff] %v81
    %263 = vst [vmem:[#allocation2 + $0x90] sm:$0xff] %v82
    %264 = vst [vmem:[#allocation2 + $0x98] sm:$0xff] %v83
    %265 = vrot.lane.b32.xlu0 %v80, 127
    %v266 = vpop.permute.xlu0 %265
    %267 = vrot.lane.b32.xlu0 %v81, 127
    %v268 = vpop.permute.xlu0 %267
    %269 = vrot.lane.b32.xlu0 %v82, 127
    %v270 = vpop.permute.xlu0 %269
    %271 = vrot.lane.b32.xlu0 %v83, 127
    %v272 = vpop.permute.xlu0 %271
    %vm273 = vcmp.lt.s32.totalorder %v93, 127
    %v274 = vsel %vm273, %v270, %v272
    %v275 = vsel %vm273, %v268, %v270
    %v276 = vsel %vm273, %v266, %v268
    %v277 = vsel %vm273, %v272, %v266
    %s278 = scalar_lea.vmem [#allocation8], 4
    %v279 = vld [vmem:[%s278] ss:$8 sm:$0xf]
    %v281 = vlaneseq
    %v282 = vshrl.u32 %v281, 7
    %v283 = vsub.s32 0, %v282
    %v284 = vrot.slane %v279, %v283
    %v285 = vlaneseq
    %v286 = vshrl.u32 %v285, 7
    %v287 = vsub.s32 1, %v286
    %v288 = vrot.slane %v279, %v287
    %v289 = vlaneseq
    %v290 = vshrl.u32 %v289, 7
    %v291 = vsub.s32 2, %v290
    %v292 = vrot.slane %v279, %v291
    %v293 = vlaneseq
    %v294 = vshrl.u32 %v293, 7
    %v295 = vsub.s32 3, %v294
    %v296 = vrot.slane %v279, %v295
    %v301 = vmul.f32 %v276, %v284
    %v302 = vmul.f32 %v275, %v288
    %v303 = vmul.f32 %v274, %v292
    %v304 = vmul.f32 %v277, %v296
    %305 = vst [vmem:[#allocation2 + $0xa0] sm:$0xff] %v301
    %306 = vst [vmem:[#allocation2 + $0xa8] sm:$0xff] %v302
    %307 = vst [vmem:[#allocation2 + $0xb0] sm:$0xff] %v303
    %308 = vst [vmem:[#allocation2 + $0xb8] sm:$0xff] %v304
    %309 = vrot.lane.b32.xlu0 %v80, 113
    %v310 = vpop.permute.xlu0 %309
    %311 = vrot.lane.b32.xlu0 %v81, 113
    %v312 = vpop.permute.xlu0 %311
    %313 = vrot.lane.b32.xlu0 %v82, 113
    %v314 = vpop.permute.xlu0 %313
    %315 = vrot.lane.b32.xlu0 %v83, 113
    %v316 = vpop.permute.xlu0 %315
    %vm317 = vcmp.lt.s32.totalorder %v93, 113
    %v318 = vsel %vm317, %v314, %v316
    %v319 = vsel %vm317, %v312, %v314
    %v320 = vsel %vm317, %v310, %v312
    %v321 = vsel %vm317, %v316, %v310
    %s322 = scalar_lea.vmem [#allocation8], 5
    %v323 = vld [vmem:[%s322] ss:$8 sm:$0xf]
    %v325 = vlaneseq
    %v326 = vshrl.u32 %v325, 7
    %v327 = vsub.s32 0, %v326
    %v328 = vrot.slane %v323, %v327
    %v329 = vlaneseq
    %v330 = vshrl.u32 %v329, 7
    %v331 = vsub.s32 1, %v330
    %v332 = vrot.slane %v323, %v331
    %v333 = vlaneseq
    %v334 = vshrl.u32 %v333, 7
    %v335 = vsub.s32 2, %v334
    %v336 = vrot.slane %v323, %v335
    %v337 = vlaneseq
    %v338 = vshrl.u32 %v337, 7
    %v339 = vsub.s32 3, %v338
    %v340 = vrot.slane %v323, %v339
    %v345 = vmul.f32 %v320, %v328
    %v346 = vmul.f32 %v319, %v332
    %v347 = vmul.f32 %v318, %v336
    %v348 = vmul.f32 %v321, %v340
    %349 = vst [vmem:[#allocation2 + $0xc0] sm:$0xff] %v345
    %350 = vst [vmem:[#allocation2 + $0xc8] sm:$0xff] %v346
    %351 = vst [vmem:[#allocation2 + $0xd0] sm:$0xff] %v347
    %352 = vst [vmem:[#allocation2 + $0xd8] sm:$0xff] %v348
    %353 = vrot.lane.b32.xlu0 %v80, 112
    %v354 = vpop.permute.xlu0 %353
    %355 = vrot.lane.b32.xlu0 %v81, 112
    %v356 = vpop.permute.xlu0 %355
    %357 = vrot.lane.b32.xlu0 %v82, 112
    %v358 = vpop.permute.xlu0 %357
    %359 = vrot.lane.b32.xlu0 %v83, 112
    %v360 = vpop.permute.xlu0 %359
    %vm361 = vcmp.lt.s32.totalorder %v93, 112
    %v362 = vsel %vm361, %v358, %v360
    %v363 = vsel %vm361, %v356, %v358
    %v364 = vsel %vm361, %v354, %v356
    %v365 = vsel %vm361, %v360, %v354
    %s366 = scalar_lea.vmem [#allocation8], 6
    %v367 = vld [vmem:[%s366] ss:$8 sm:$0xf]
    %v369 = vlaneseq
    %v370 = vshrl.u32 %v369, 7
    %v371 = vsub.s32 0, %v370
    %v372 = vrot.slane %v367, %v371
    %v373 = vlaneseq
    %v374 = vshrl.u32 %v373, 7
    %v375 = vsub.s32 1, %v374
    %v376 = vrot.slane %v367, %v375
    %v377 = vlaneseq
    %v378 = vshrl.u32 %v377, 7
    %v379 = vsub.s32 2, %v378
    %v380 = vrot.slane %v367, %v379
    %v381 = vlaneseq
    %v382 = vshrl.u32 %v381, 7
    %v383 = vsub.s32 3, %v382
    %v384 = vrot.slane %v367, %v383
    %v389 = vmul.f32 %v364, %v372
    %v390 = vmul.f32 %v363, %v376
    %v391 = vmul.f32 %v362, %v380
    %v392 = vmul.f32 %v365, %v384
    %393 = vst [vmem:[#allocation2 + $0xe0] sm:$0xff] %v389
    %394 = vst [vmem:[#allocation2 + $0xe8] sm:$0xff] %v390
    %395 = vst [vmem:[#allocation2 + $0xf0] sm:$0xff] %v391
    %396 = vst [vmem:[#allocation2 + $0xf8] sm:$0xff] %v392
    %397 = vrot.lane.b32.xlu0 %v80, 111
    %v398 = vpop.permute.xlu0 %397
    %399 = vrot.lane.b32.xlu0 %v81, 111
    %v400 = vpop.permute.xlu0 %399
    %401 = vrot.lane.b32.xlu0 %v82, 111
    %v402 = vpop.permute.xlu0 %401
    %403 = vrot.lane.b32.xlu0 %v83, 111
    %v404 = vpop.permute.xlu0 %403
    %vm405 = vcmp.lt.s32.totalorder %v93, 111
    %v406 = vsel %vm405, %v402, %v404
    %v407 = vsel %vm405, %v400, %v402
    %v408 = vsel %vm405, %v398, %v400
    %v409 = vsel %vm405, %v404, %v398
    %s410 = scalar_lea.vmem [#allocation8], 7
    %v411 = vld [vmem:[%s410] ss:$8 sm:$0xf]
    %v413 = vlaneseq
    %v414 = vshrl.u32 %v413, 7
    %v415 = vsub.s32 0, %v414
    %v416 = vrot.slane %v411, %v415
    %v417 = vlaneseq
    %v418 = vshrl.u32 %v417, 7
    %v419 = vsub.s32 1, %v418
    %v420 = vrot.slane %v411, %v419
    %v421 = vlaneseq
    %v422 = vshrl.u32 %v421, 7
    %v423 = vsub.s32 2, %v422
    %v424 = vrot.slane %v411, %v423
    %v425 = vlaneseq
    %v426 = vshrl.u32 %v425, 7
    %v427 = vsub.s32 3, %v426
    %v428 = vrot.slane %v411, %v427
    %v433 = vmul.f32 %v408, %v416
    %v434 = vmul.f32 %v407, %v420
    %v435 = vmul.f32 %v406, %v424
    %v436 = vmul.f32 %v409, %v428
    %437 = vst [vmem:[#allocation2 + $0x100] sm:$0xff] %v433
    %438 = vst [vmem:[#allocation2 + $0x108] sm:$0xff] %v434
    %439 = vst [vmem:[#allocation2 + $0x110] sm:$0xff] %v435
    %440 = vst [vmem:[#allocation2 + $0x118] sm:$0xff] %v436
    %v441 = vld [vmem:[%s3] sm:$0xff]
    %v442 = vld [vmem:[#allocation2] sm:$0xff]
    %v443 = vld [vmem:[#allocation2 + $0x8] sm:$0xff]
    %v444 = vld [vmem:[#allocation2 + $0x10] sm:$0xff]
    %v445 = vld [vmem:[#allocation2 + $0x18] sm:$0xff]
    %v446 = vld [vmem:[#allocation2 + $0x20] sm:$0xff]
    %v447 = vld [vmem:[#allocation2 + $0x28] sm:$0xff]
    %v448 = vld [vmem:[#allocation2 + $0x30] sm:$0xff]
    %v449 = vld [vmem:[#allocation2 + $0x38] sm:$0xff]
    %v450 = vld [vmem:[#allocation2 + $0x40] sm:$0xff]
    %v451 = vld [vmem:[#allocation2 + $0x48] sm:$0xff]
    %v452 = vld [vmem:[#allocation2 + $0x50] sm:$0xff]
    %v453 = vld [vmem:[#allocation2 + $0x58] sm:$0xff]
    %v454 = vld [vmem:[#allocation2 + $0x60] sm:$0xff]
    %v455 = vld [vmem:[#allocation2 + $0x68] sm:$0xff]
    %v456 = vld [vmem:[#allocation2 + $0x70] sm:$0xff]
    %v457 = vld [vmem:[#allocation2 + $0x78] sm:$0xff]
    %v458 = vld [vmem:[#allocation2 + $0x80] sm:$0xff]
    %v459 = vld [vmem:[#allocation2 + $0x88] sm:$0xff]
    %v460 = vld [vmem:[#allocation2 + $0x90] sm:$0xff]
    %v461 = vld [vmem:[#allocation2 + $0x98] sm:$0xff]
    %v462 = vld [vmem:[#allocation2 + $0xa0] sm:$0xff]
    %v463 = vld [vmem:[#allocation2 + $0xa8] sm:$0xff]
    %v464 = vld [vmem:[#allocation2 + $0xb0] sm:$0xff]
    %v465 = vld [vmem:[#allocation2 + $0xb8] sm:$0xff]
    %v466 = vld [vmem:[#allocation2 + $0xc0] sm:$0xff]
    %v467 = vld [vmem:[#allocation2 + $0xc8] sm:$0xff]
    %v468 = vld [vmem:[#allocation2 + $0xd0] sm:$0xff]
    %v469 = vld [vmem:[#allocation2 + $0xd8] sm:$0xff]
    %v470 = vld [vmem:[#allocation2 + $0xe0] sm:$0xff]
    %v471 = vld [vmem:[#allocation2 + $0xe8] sm:$0xff]
    %v472 = vld [vmem:[#allocation2 + $0xf0] sm:$0xff]
    %v473 = vld [vmem:[#allocation2 + $0xf8] sm:$0xff]
    %v474 = vld [vmem:[#allocation2 + $0x100] sm:$0xff]
    %v475 = vld [vmem:[#allocation2 + $0x108] sm:$0xff]
    %v476 = vld [vmem:[#allocation2 + $0x110] sm:$0xff]
    %v477 = vld [vmem:[#allocation2 + $0x118] sm:$0xff]
    %vm478 = vcmask 588800
    %v480 = vsel %vm478, %v441, 0
    %482 = vmatprep.subr.mxu0 %v443
    %483 = vmatpush1.msra.mxu0 %v442
    %484 = vmatprep.subr.mxu0 %v447
    %485 = vmatpush1.msra.mxu0 %v446
    %486 = vmatprep.subr.mxu0 %v451
    %487 = vmatpush1.msra.mxu0 %v450
    %488 = vmatprep.subr.mxu0 %v455
    %489 = vmatpush1.msra.mxu0 %v454
    %490 = vmatprep.subr.mxu0 %v459
    %491 = vmatpush1.msra.mxu0 %v458
    %492 = vmatprep.subr.mxu0 %v463
    %493 = vmatpush1.msra.mxu0 %v462
    %494 = vmatprep.subr.mxu0 %v467
    %495 = vmatpush1.msra.mxu0 %v466
    %496 = vmatprep.subr.mxu0 %v471
    %497 = vmatpush1.msra.mxu0 %v470
    %498 = vmatprep.subr.mxu0 %v475
    %499 = vmatpush1.msra.mxu0 %v474
    %500 = vmatprep.subr.mxu0 0.0
    %501 = vmatpush1.msra.mxu0 0.0
    %502 = vmatprep.subr.mxu0 0.0
    %503 = vmatpush1.msra.mxu0 0.0
    %504 = vmatprep.subr.mxu0 0.0
    %505 = vmatpush1.msra.mxu0 0.0
    %506 = vmatprep.subr.mxu0 0.0
    %507 = vmatpush1.msra.mxu0 0.0
    %508 = vmatprep.subr.mxu0 0.0
    %509 = vmatpush1.msra.mxu0 0.0
    %510 = vmatprep.subr.mxu0 0.0
    %511 = vmatpush1.msra.mxu0 0.0
    %512 = vmatprep.subr.mxu0 0.0
    %513 = vmatpush1.msra.mxu0 0.0
    %514 = vmatprep.subr.mxu0 0.0
    %515 = vmatpush1.msra.mxu0 0.0
    %516 = vmatprep.subr.mxu0 0.0
    %517 = vmatpush1.msra.mxu0 0.0
    %518 = vmatprep.subr.mxu0 0.0
    %519 = vmatpush1.msra.mxu0 0.0
    %520 = vmatprep.subr.mxu0 0.0
    %521 = vmatpush1.msra.mxu0 0.0
    %522 = vmatprep.subr.mxu0 0.0
    %523 = vmatpush1.msra.mxu0 0.0
    %524 = vmatprep.subr.mxu0 0.0
    %525 = vmatpush1.msra.mxu0 0.0
    %526 = vmatprep.subr.mxu0 0.0
    %527 = vmatpush1.msra.mxu0 0.0
    %528 = vmatprep.subr.mxu0 0.0
    %529 = vmatpush1.msra.mxu0 0.0
    %530 = vmatprep.subr.mxu0 0.0
    %531 = vmatpush1.msra.mxu0 0.0
    %532 = vmatprep.subr.mxu0 0.0
    %533 = vmatpush1.msra.mxu0 0.0
    %534 = vmatprep.subr.mxu0 0.0
    %535 = vmatpush1.msra.mxu0 0.0
    %536 = vmatprep.subr.mxu0 0.0
    %537 = vmatpush1.msra.mxu0 0.0
    %538 = vmatprep.subr.mxu0 0.0
    %539 = vmatpush1.msra.mxu0 0.0
    %540 = vmatprep.subr.mxu0 0.0
    %541 = vmatpush1.msra.mxu0 0.0
    %542 = vmatprep.subr.mxu0 0.0
    %543 = vmatpush1.msra.mxu0 0.0
    %544 = vmatprep.subr.mxu0 0.0
    %545 = vmatpush1.msra.mxu0 0.0
    %546 = vmatprep.mubr.f32.mxu0 0.0
    %547 = vmatmul.mubr.f32.gmra.mrb[0].mxu0 %v480
    %v548 = vpop.f32.mrb[0].mxu0
    %v549 = vadd.f32 0.0, %v548
    %v550 = vpop.f32.mrb[0].mxu0
    %v551 = vadd.f32 0.0, %v550
    %552 = vdwg.mxu0
    %553 = vmatprep.subr.mxu0 %v445
    %554 = vmatpush1.msra.mxu0 %v444
    %555 = vmatprep.subr.mxu0 %v449
    %556 = vmatpush1.msra.mxu0 %v448
    %557 = vmatprep.subr.mxu0 %v453
    %558 = vmatpush1.msra.mxu0 %v452
    %559 = vmatprep.subr.mxu0 %v457
    %560 = vmatpush1.msra.mxu0 %v456
    %561 = vmatprep.subr.mxu0 %v461
    %562 = vmatpush1.msra.mxu0 %v460
    %563 = vmatprep.subr.mxu0 %v465
    %564 = vmatpush1.msra.mxu0 %v464
    %565 = vmatprep.subr.mxu0 %v469
    %566 = vmatpush1.msra.mxu0 %v468
    %567 = vmatprep.subr.mxu0 %v473
    %568 = vmatpush1.msra.mxu0 %v472
    %569 = vmatprep.subr.mxu0 %v477
    %570 = vmatpush1.msra.mxu0 %v476
    %571 = vmatprep.subr.mxu0 0.0
    %572 = vmatpush1.msra.mxu0 0.0
    %573 = vmatprep.subr.mxu0 0.0
    %574 = vmatpush1.msra.mxu0 0.0
    %575 = vmatprep.subr.mxu0 0.0
    %576 = vmatpush1.msra.mxu0 0.0
    %577 = vmatprep.subr.mxu0 0.0
    %578 = vmatpush1.msra.mxu0 0.0
    %579 = vmatprep.subr.mxu0 0.0
    %580 = vmatpush1.msra.mxu0 0.0
    %581 = vmatprep.subr.mxu0 0.0
    %582 = vmatpush1.msra.mxu0 0.0
    %583 = vmatprep.subr.mxu0 0.0
    %584 = vmatpush1.msra.mxu0 0.0
    %585 = vmatprep.subr.mxu0 0.0
    %586 = vmatpush1.msra.mxu0 0.0
    %587 = vmatprep.subr.mxu0 0.0
    %588 = vmatpush1.msra.mxu0 0.0
    %589 = vmatprep.subr.mxu0 0.0
    %590 = vmatpush1.msra.mxu0 0.0
    %591 = vmatprep.subr.mxu0 0.0
    %592 = vmatpush1.msra.mxu0 0.0
    %593 = vmatprep.subr.mxu0 0.0
    %594 = vmatpush1.msra.mxu0 0.0
    %595 = vmatprep.subr.mxu0 0.0
    %596 = vmatpush1.msra.mxu0 0.0
    %597 = vmatprep.subr.mxu0 0.0
    %598 = vmatpush1.msra.mxu0 0.0
    %599 = vmatprep.subr.mxu0 0.0
    %600 = vmatpush1.msra.mxu0 0.0
    %601 = vmatprep.subr.mxu0 0.0
    %602 = vmatpush1.msra.mxu0 0.0
    %603 = vmatprep.subr.mxu0 0.0
    %604 = vmatpush1.msra.mxu0 0.0
    %605 = vmatprep.subr.mxu0 0.0
    %606 = vmatpush1.msra.mxu0 0.0
    %607 = vmatprep.subr.mxu0 0.0
    %608 = vmatpush1.msra.mxu0 0.0
    %609 = vmatprep.subr.mxu0 0.0
    %610 = vmatpush1.msra.mxu0 0.0
    %611 = vmatprep.subr.mxu0 0.0
    %612 = vmatpush1.msra.mxu0 0.0
    %613 = vmatprep.subr.mxu0 0.0
    %614 = vmatpush1.msra.mxu0 0.0
    %615 = vmatprep.subr.mxu0 0.0
    %616 = vmatpush1.msra.mxu0 0.0
    %617 = vmatprep.mubr.f32.mxu0 0.0
    %618 = vmatmul.mubr.f32.gmra.mrb[0].mxu0 %v480
    %v619 = vpop.f32.mrb[0].mxu0
    %v620 = vadd.f32 0.0, %v619
    %v621 = vpop.f32.mrb[0].mxu0
    %v622 = vadd.f32 0.0, %v621
    %623 = vdwg.mxu0
    %624 = vst [vmem:[#allocation9] sm:$0xff] %v549
    %625 = vst [vmem:[#allocation9 + $0x8] sm:$0xff] %v551
    %626 = vst [vmem:[#allocation9 + $0x10] sm:$0xff] %v620
    %627 = vst [vmem:[#allocation9 + $0x18] sm:$0xff] %v622
    // Predicated region
    $region30: #{tpu_custom_call.1} parent=1 // pred_check
      _
    $region31: #{tpu_custom_call.1} parent=1 // pred_check_branch
      %629 = sbr.rel (0) target = $region33
    $region32: #{tpu_custom_call.1} parent=1 // pred_region
      %s631 = ssub.s32 512, 512
      %632 = vsyncadd [#allocation5], %s631
      %s634 = sshll.u32 [#allocation9], 4
      %s635 = int_to_ptr.vmem [resolvable:$true] %s634
      %637 = dma.vmem_to_hbm [thread:$0]  %s635, 512, %s4, [#allocation5]
    $region33: #{tpu_custom_call.1} parent=1 // pred_fallthru
      _
    // Predicated region
    $region34: #{tpu_custom_call.1} parent=1 // pred_check
      _
    $region35: #{tpu_custom_call.1} parent=1 // pred_check_branch
      %639 = sbr.rel (0) target = $region37
    $region36: #{tpu_custom_call.1} parent=1 // pred_region
      %640 = dma.done [#allocation5], 512
    $region37: #{tpu_custom_call.1} parent=1 // pred_fallthru
      _
    %641 = vsyncpa [#allocation4], 1
    %642 = vsyncpa [#allocation7], 1
    %643 = vsyncpa [#allocation5], 1

</llo_original>
